<compile_context>
chip_gen: v7x
topology: tpu7x:2x2x1
jax: 0.10.0
libtpu: 0.0.40
codegen_flags: <defaults>
</compile_context>

<pallas_src>
import functools

import jax
import jax.numpy as jnp
from jax.experimental import pallas as pl
from jax.experimental.pallas import tpu as pltpu

MARGIN = 2.0
PAIRWISE_EPS = 1e-6  # matches torch.nn.functional.pairwise_distance default eps


def _dist_kernel(o1_ref, o2_ref, dist_ref):
    # o1_ref/o2_ref: (tB, D) native dtype; dist_ref: (1, tB) f32 (lane-dense).
    a = o1_ref[...].astype(jnp.float32)
    b = o2_ref[...].astype(jnp.float32)
    diff = a - b + PAIRWISE_EPS                           # (tB, D), f32
    d = diff.shape[-1]
    if d > 128 and d % 128 == 0:
        # Keep the inner accumulation on the VPU ((tB,128) partials) and do a
        # single cross-lane (XLU) reduce at the end.
        acc = jnp.zeros((diff.shape[0], 128), jnp.float32)
        for k in range(d // 128):
            c = diff[:, k * 128:(k + 1) * 128]
            acc = acc + c * c
        sq = jnp.sum(acc, axis=-1)                        # (tB,)
    else:
        sq = jnp.sum(diff * diff, axis=-1)                # (tB,)
    dist_ref[...] = jnp.sqrt(sq).reshape(1, -1)


def _loss_kernel(dist_ref, label_ref, weight_ref, out_ref, *, batch, margin):
    # dist/label/weight: (1, B_pad) f32 lane-dense; out: (1, 1) f32.
    d = dist_ref[...]
    lab = label_ref[...]
    w = weight_ref[...]
    if d.shape[-1] != batch:  # only traced when the batch was padded
        col = jax.lax.broadcasted_iota(jnp.int32, d.shape, 1)
        d = jnp.where(col < batch, d, 0.0)
    mean_d = jnp.sum(d) * (1.0 / batch)
    ed = d / mean_d                                        # exact, single scalar divide
    tmp1 = lab * (ed * ed)
    clamped = jnp.maximum(margin - ed, 0.0)
    tmp2 = (1.0 - lab) * (clamped * clamped)
    # Padded rows contribute 0 because their weight was zero-padded.
    loss = jnp.sum((tmp1 + tmp2) * w) * (1.0 / batch)
    out_ref[...] = jnp.reshape(loss, (1, 1))


def _choose_block_rows(B, D, itemsize, block_rows=None):
    """Pick batch-tile rows so 2 inputs x 2 pipeline buffers fit ~20 MiB of VMEM."""
    if block_rows is None:
        budget = 20 << 20
        per_block = budget // 4                            # 2 inputs x 2 pipeline buffers
        block_rows = per_block // max(1, D * itemsize)
        block_rows = max(128, min(1024, (block_rows // 128) * 128))
    if B <= block_rows:
        return B, 1, B                                     # single full block (no alignment needed)
    tB = max(128, (int(block_rows) // 128) * 128)          # lane/sublane aligned tiles
    nT = -(-B // tB)
    return tB, nT, nT * tB


def contrastive_loss(output1, output2, label, weight, margin=MARGIN, block_rows=None):
    """output1/output2: [B, D]; label/weight: [B]. Returns scalar f32 loss."""
    B, D = output1.shape
    tB, nT, B_pad = _choose_block_rows(B, D, output1.dtype.itemsize, block_rows)

    o1, o2 = output1, output2                              # keep native dtype (no wrapper upcast)
    lab = label.astype(jnp.float32).reshape(1, B)          # lane-dense
    w = weight.astype(jnp.float32).reshape(1, B)
    if B_pad != B:
        o1 = jnp.pad(o1, ((0, B_pad - B), (0, 0)))
        o2 = jnp.pad(o2, ((0, B_pad - B), (0, 0)))
        lab = jnp.pad(lab, ((0, 0), (0, B_pad - B)))
        w = jnp.pad(w, ((0, 0), (0, B_pad - B)))

    # Pass 1: per-row Euclidean distance, tiled & pipelined over the batch.
    dist = pl.pallas_call(
        _dist_kernel,
        out_shape=jax.ShapeDtypeStruct((1, B_pad), jnp.float32),
        grid_spec=pltpu.PrefetchScalarGridSpec(
            num_scalar_prefetch=0,
            grid=(nT,),
            in_specs=[
                pl.BlockSpec((tB, D), lambda i: (i, 0)),
                pl.BlockSpec((tB, D), lambda i: (i, 0)),
            ],
            out_specs=pl.BlockSpec((1, tB), lambda i: (0, i)),
        ),
        compiler_params=pltpu.CompilerParams(
            dimension_semantics=("parallel",),
            vmem_limit_bytes=32 * 1024 * 1024,
        ),
    )(o1, o2)

    # Pass 2: O(B) epilogue (mean, normalize, clamp, weighted mean).
    loss = pl.pallas_call(
        functools.partial(_loss_kernel, batch=B, margin=float(margin)),
        out_shape=jax.ShapeDtypeStruct((1, 1), jnp.float32),
        grid_spec=pltpu.PrefetchScalarGridSpec(
            num_scalar_prefetch=0,
            grid=(),
            in_specs=[
                pl.BlockSpec((1, B_pad), lambda: (0, 0)),
                pl.BlockSpec((1, B_pad), lambda: (0, 0)),
                pl.BlockSpec((1, B_pad), lambda: (0, 0)),
            ],
            out_specs=pl.BlockSpec((1, 1), lambda: (0, 0)),
        ),
    )(dist, lab, w)
    return loss[0, 0]


def _reference(output1, output2, label, weight, margin=MARGIN):
    # Pure-JAX mirror of the PyTorch forward for sanity checking.
    o1 = output1.astype(jnp.float32)
    o2 = output2.astype(jnp.float32)
    diff = o1 - o2 + PAIRWISE_EPS
    ed = jnp.sqrt(jnp.sum(diff * diff, axis=-1, keepdims=True))   # (B, 1)
    ed = ed / jnp.mean(ed)
    tmp1 = label * jnp.squeeze(ed ** 2, -1)
    tmp2 = (1.0 - label) * jnp.squeeze(jnp.maximum(margin - ed, 0.0) ** 2, -1)
    return jnp.mean((tmp1 + tmp2) * weight)


if __name__ == "__main__":
    key = jax.random.PRNGKey(0)

    def _case(B, D, dtype, block_rows=None, tol=1e-5):
        k1, k2, k3, k4 = jax.random.split(jax.random.fold_in(key, B * 131 + D), 4)
        o1 = jax.random.normal(k1, (B, D), dtype=jnp.float32).astype(dtype)
        o2 = jax.random.normal(k2, (B, D), dtype=jnp.float32).astype(dtype)
        lab = jax.random.bernoulli(k3, 0.5, (B,)).astype(jnp.float32)
        w = jax.random.uniform(k4, (B,), dtype=jnp.float32, minval=0.5, maxval=1.5)
        got = jax.block_until_ready(contrastive_loss(o1, o2, lab, w, block_rows=block_rows))
        ref = _reference(o1, o2, lab, w)
        assert jnp.allclose(got, ref, rtol=tol, atol=tol), (B, D, str(dtype), got, ref)

    _case(8, 32, jnp.float32)                      # small primary case (single block)
    _case(200, 32, jnp.float32, block_rows=128)    # multi-tile grid + padding/masking path
    _case(8, 32, jnp.bfloat16)                     # native-dtype (no wrapper upcast) path

    print("KERNEL_OK")
</pallas_src>

<mosaic_0001>
module attributes {stable_mosaic.version = 11 : i64} {
  func.func @_dist_kernel(%arg0: i32, %arg1: memref<8x32xf32, #tpu.memory_space<vmem>>, %arg2: memref<8x32xf32, #tpu.memory_space<vmem>>, %arg3: memref<1x8xf32, #tpu.memory_space<vmem>>) attributes {dimension_semantics = [#tpu.dimension_semantics<parallel>], iteration_bounds = array<i64: 1>, scalar_prefetch = 0 : i64, scratch_operands = 0 : i64, tpu.core_type = #tpu.core_type<tc>, window_params = [{transform_indices = @transform_0, window_bounds = array<i64: 8, 32>}, {transform_indices = @transform_1, window_bounds = array<i64: 8, 32>}, {transform_indices = @transform_2, window_bounds = array<i64: 1, 8>}]} {
    %c0 = arith.constant 0 : index
    %c0_0 = arith.constant 0 : index
    %0 = vector.load %arg1[%c0, %c0_0] : memref<8x32xf32, #tpu.memory_space<vmem>>, vector<8x32xf32>
    %c0_1 = arith.constant 0 : index
    %c0_2 = arith.constant 0 : index
    %1 = vector.load %arg2[%c0_1, %c0_2] : memref<8x32xf32, #tpu.memory_space<vmem>>, vector<8x32xf32>
    %2 = arith.subf %0, %1 : vector<8x32xf32>
    %cst = arith.constant 9.99999997E-7 : f32
    %3 = vector.broadcast %cst : f32 to vector<8x32xf32>
    %4 = arith.addf %2, %3 : vector<8x32xf32>
    %5 = arith.mulf %4, %4 : vector<8x32xf32>
    %cst_3 = arith.constant dense<0.000000e+00> : vector<8xf32>
    %6 = vector.multi_reduction <add>, %5, %cst_3 [1] : vector<8x32xf32> to vector<8xf32>
    %7 = math.sqrt %6 : vector<8xf32>
    %8 = vector.shape_cast %7 : vector<8xf32> to vector<1x8xf32>
    %c0_4 = arith.constant 0 : index
    %c0_5 = arith.constant 0 : index
    %9 = vector.load %arg3[%c0_4, %c0_5] : memref<1x8xf32, #tpu.memory_space<vmem>>, vector<1x8xf32>
    tpu.vector_store %arg3[%c0_4, %c0_5], %8 {strides = array<i32>} : memref<1x8xf32, #tpu.memory_space<vmem>>, vector<1x8xf32>,
    return
  }
  func.func @transform_0(%arg0: i32) -> (i32, i32) {
    %c0_i32 = arith.constant 0 : i32
    %c0_i32_0 = arith.constant 0 : i32
    return %arg0, %c0_i32 : i32, i32
  }
  func.func @transform_1(%arg0: i32) -> (i32, i32) {
    %c0_i32 = arith.constant 0 : i32
    %c0_i32_0 = arith.constant 0 : i32
    return %arg0, %c0_i32 : i32, i32
  }
  func.func @transform_2(%arg0: i32) -> (i32, i32) {
    %c0_i32 = arith.constant 0 : i32
    %c0_i32_0 = arith.constant 0 : i32
    return %c0_i32, %arg0 : i32, i32
  }
}

</mosaic_0001>

<llo_original>
// kernel: tpu_custom_call.1
$region0: #{tpu_custom_call.1}
  #allocation0 [shape = 'u32[]', space=smem, size = 0x4, offset = 0x4, fixed_abs, tag = 'smem constant byte address 0x4 - core index']
  #allocation1 [shape = 'u32[144,128]{1,0:T(1,128)}', space=vmem, size = 0x12000, scoped, tag = 'internal scratch']
  %s0 = inlined_call_operand.hbm [shape: f32[8,32], index: 0, kind: input, shape index: {}]
  %s1 = inlined_call_operand.hbm [shape: f32[8,32], index: 1, kind: input, shape index: {}]
  %s2 = inlined_call_operand.hbm [shape: f32[1,8], index: 2, kind: output, shape index: {}]
  %s3 = sld [smem:[#allocation0]]
  $region26: #{tpu_custom_call.1} parent=0
    _
  %s5 = ssub.s32 1, %s3
  %s6 = scalar_select 0, %s5, %s3
  $region1: #{tpu_custom_call.1} parent=0
    #allocation2 [shape = 'u8[4096]{0}', space=vmem, size = 0x1000, scoped, tag = 'input window, operand 0, single buffered']
    #allocation3 [shape = 's32[1]{0}', space=sflag, size = 0x4, scoped, tag = 'scoped memory for tpu_custom_call.1']
    #allocation4 [shape = 's32[1]{0}', space=sflag, size = 0x4, scoped, tag = 'scoped memory for tpu_custom_call.1']
    #allocation5 [shape = 'u8[4096]{0}', space=vmem, size = 0x1000, scoped, tag = 'input window, operand 1, single buffered']
    #allocation6 [shape = 's32[1]{0}', space=sflag, size = 0x4, scoped, tag = 'scoped memory for tpu_custom_call.1']
    #allocation7 [shape = 'u8[512]{0}', space=vmem, size = 0x400, scoped, tag = 'output window, operand 0, single buffered']
    %7 = vsyncpa [#allocation3], 0
    %8 = vsyncpa [#allocation6], 0
    %9 = vsyncpa [#allocation4], 0
    // Predicated region
    $region2: #{tpu_custom_call.1} parent=1 // pred_check
      _
    $region3: #{tpu_custom_call.1} parent=1 // pred_check_branch
      %11 = sbr.rel (0) target = $region5
    $region4: #{tpu_custom_call.1} parent=1 // pred_region
      %s13 = ssub.s32 128, 128
      %14 = vsyncadd [#allocation3], %s13
      %s16 = sshll.u32 [#allocation2], 4
      %s17 = int_to_ptr.vmem [resolvable:$true] %s16
      %19 = dma.hbm_to_vmem [thread:$0]  %s0, 128, %s17, [#allocation3]
    $region5: #{tpu_custom_call.1} parent=1 // pred_fallthru
      _
    // Predicated region
    $region6: #{tpu_custom_call.1} parent=1 // pred_check
      _
    $region7: #{tpu_custom_call.1} parent=1 // pred_check_branch
      %21 = sbr.rel (0) target = $region9
    $region8: #{tpu_custom_call.1} parent=1 // pred_region
      %s23 = ssub.s32 128, 128
      %24 = vsyncadd [#allocation6], %s23
      %s26 = sshll.u32 [#allocation5], 4
      %s27 = int_to_ptr.vmem [resolvable:$true] %s26
      %29 = dma.hbm_to_vmem [thread:$0]  %s1, 128, %s27, [#allocation6]
    $region9: #{tpu_custom_call.1} parent=1 // pred_fallthru
      _
    // Predicated region
    $region10: #{tpu_custom_call.1} parent=1 // pred_check
      _
    $region11: #{tpu_custom_call.1} parent=1 // pred_check_branch
      %31 = sbr.rel (0) target = $region13
    $region12: #{tpu_custom_call.1} parent=1 // pred_region
      %32 = dma.done [#allocation3], 128
    $region13: #{tpu_custom_call.1} parent=1 // pred_fallthru
      _
    // Predicated region
    $region14: #{tpu_custom_call.1} parent=1 // pred_check
      _
    $region15: #{tpu_custom_call.1} parent=1 // pred_check_branch
      %34 = sbr.rel (0) target = $region17
    $region16: #{tpu_custom_call.1} parent=1 // pred_region
      %35 = dma.done [#allocation6], 128
    $region17: #{tpu_custom_call.1} parent=1 // pred_fallthru
      _
    %v36 = vld [vmem:[#allocation2] sm:$0xff]
    %v37 = vld [vmem:[#allocation5] sm:$0xff]
    %v38 = vsub.f32 %v36, %v37
    %v39 = vadd.f32 %v38, 1e-06
    %v40 = vmul.f32 %v39, %v39
    %vm41 = vcmask 261120
    %v42 = vsel %vm41, %v40, 0.0
    %43 = vadd.xlane.f32.xlu0 %v42
    %v44 = vpop.xlane.xlu0 %43
    %v45 = vrsqrt.pop %v44
    %v46 = vmul.f32 %v44, %v45
    %vm47 = vcmp.eq.f32.partialorder %v44, inf
    %v48 = vsel %vm47, %v44, %v46
    %vm49 = vcmp.eq.f32.partialorder %v44, 0.0
    %v50 = vand.u32 %v44, 2147483648
    %v51 = vsel %vm49, %v50, %v48
    %v53 = vlaneseq
    %v54 = vand.u32 %v53, 127
    %v55 = vlaneseq
    %v56 = vshrl.u32 %v55, 7
    %v57 = vsub.s32 %v54, %v56
    %v58 = vrot.slane %v51, %v57
    %vm60 = vcmask 57344
    %61 = vst.msk [vmem:[#allocation7] sm:$0x1] %vm60, %v58
    // Predicated region
    $region18: #{tpu_custom_call.1} parent=1 // pred_check
      _
    $region19: #{tpu_custom_call.1} parent=1 // pred_check_branch
      %63 = sbr.rel (0) target = $region21
    $region20: #{tpu_custom_call.1} parent=1 // pred_region
      %s65 = ssub.s32 16, 16
      %66 = vsyncadd [#allocation4], %s65
      %s68 = sshll.u32 [#allocation7], 4
      %s69 = int_to_ptr.vmem [resolvable:$true] %s68
      %71 = dma.vmem_to_hbm [thread:$0]  %s69, 16, %s2, [#allocation4]
    $region21: #{tpu_custom_call.1} parent=1 // pred_fallthru
      _
    // Predicated region
    $region22: #{tpu_custom_call.1} parent=1 // pred_check
      _
    $region23: #{tpu_custom_call.1} parent=1 // pred_check_branch
      %73 = sbr.rel (0) target = $region25
    $region24: #{tpu_custom_call.1} parent=1 // pred_region
      %74 = dma.done [#allocation4], 16
    $region25: #{tpu_custom_call.1} parent=1 // pred_fallthru
      _
    %75 = vsyncpa [#allocation3], 1
    %76 = vsyncpa [#allocation6], 1
    %77 = vsyncpa [#allocation4], 1

</llo_original>
